<compile_context>
chip_gen: v7x
topology: tpu7x:2x2x1
jax: 0.10.0
libtpu: 0.0.40
codegen_flags: <defaults>
</compile_context>

<pallas_src>
import functools

import jax
import jax.numpy as jnp
from jax.experimental import pallas as pl
from jax.experimental.pallas import tpu as pltpu


# ---------------------------------------------------------------------------
# Small host-side helpers
# ---------------------------------------------------------------------------

def _round_up(x, m):
    return ((x + m - 1) // m) * m


def _pick_tile(dim, target, granule):
    """Largest multiple of `granule` that divides `dim` and is <= `target`.

    Falls back to the full dim (always a legal block dim)."""
    t = min(dim, target)
    t -= t % granule
    while t >= granule:
        if dim % t == 0:
            return t
        t -= granule
    return dim


def _pick_chunk(T, target):
    """Largest divisor of T that is <= target (time-chunk length)."""
    t = min(T, target)
    while T % t != 0:
        t -= 1
    return t


# ---------------------------------------------------------------------------
# Pass A / C: tiled matmul with bias (MXU-friendly, fully parallel grid)
# ---------------------------------------------------------------------------

def _matmul_bias_kernel(a_ref, b_ref, bias_ref, o_ref, acc_ref):
    k = pl.program_id(2)

    @pl.when(k == 0)
    def _():
        acc_ref[...] = jnp.zeros_like(acc_ref)

    acc_ref[...] += jnp.dot(a_ref[...], b_ref[...],
                            preferred_element_type=jnp.float32)

    @pl.when(k == pl.num_programs(2) - 1)
    def _():
        o_ref[...] = (acc_ref[...] + bias_ref[...]).astype(o_ref.dtype)


def _matmul_bias(a, b, bias, *, tm_target=256, tn_target=256, tk_target=512):
    """(M, K) @ (K, N) + (1, N) -> (M, N), f32 accumulation."""
    M, K = a.shape
    _, N = b.shape
    tm = _pick_tile(M, tm_target, 8)
    tn = _pick_tile(N, tn_target, 128)
    tk = _pick_tile(K, tk_target, 128)
    grid = (M // tm, N // tn, K // tk)

    return pl.pallas_call(
        _matmul_bias_kernel,
        out_shape=jax.ShapeDtypeStruct((M, N), jnp.float32),
        grid_spec=pltpu.PrefetchScalarGridSpec(
            num_scalar_prefetch=0,
            grid=grid,
            in_specs=[
                pl.BlockSpec((tm, tk), lambda i, j, k: (i, k)),
                pl.BlockSpec((tk, tn), lambda i, j, k: (k, j)),
                pl.BlockSpec((1, tn), lambda i, j, k: (0, j)),
            ],
            out_specs=pl.BlockSpec((tm, tn), lambda i, j, k: (i, j)),
            scratch_shapes=[pltpu.VMEM((tm, tn), jnp.float32)],
        ),
        compiler_params=pltpu.CompilerParams(
            dimension_semantics=("parallel", "parallel", "arbitrary"),
            vmem_limit_bytes=48 * 1024 * 1024,
        ),
    )(a, b, bias)


# ---------------------------------------------------------------------------
# Pass B: the serial LSTM recurrence (time-chunked, state in VMEM scratch)
# ---------------------------------------------------------------------------

def _lstm_recurrence_kernel(gx_ref, wh_ref, h_out_ref, c_ref, h_ref,
                            *, hidden, t_chunk):
    # state = None at the very first step  ->  zeros
    @pl.when(pl.program_id(0) == 0)
    def _():
        c_ref[...] = jnp.zeros_like(c_ref)
        h_ref[...] = jnp.zeros_like(h_ref)

    def step(s, carry):
        # gates_x[t] was precomputed (x @ Wx + b); only h @ Wh stays serial.
        gates = gx_ref[s] + jnp.dot(h_ref[...], wh_ref[...],
                                    preferred_element_type=jnp.float32)
        # hidden == H_pad (multiple of 128) -> lane-aligned gate slices.
        f = jax.nn.sigmoid(gates[:, 0 * hidden:1 * hidden])
        i = jax.nn.sigmoid(gates[:, 1 * hidden:2 * hidden])
        g = jnp.tanh(gates[:, 2 * hidden:3 * hidden])
        o = jax.nn.sigmoid(gates[:, 3 * hidden:4 * hidden])

        c_new = f * c_ref[...] + i * g
        h_new = o * jnp.tanh(c_new)

        c_ref[...] = c_new
        h_ref[...] = h_new
        h_out_ref[s] = h_new.astype(h_out_ref.dtype)
        return carry

    jax.lax.fori_loop(0, t_chunk, step, 0, unroll=True)


def _lstm_recurrence(gates_x, wh, *, hidden, chunk_target=16):
    """gates_x: (T, B_pad, 4*H_pad), wh: (H_pad, 4*H_pad) -> h: (T, B_pad, H_pad)."""
    T, B, G = gates_x.shape
    t_chunk = _pick_chunk(T, chunk_target)
    kernel = functools.partial(_lstm_recurrence_kernel,
                               hidden=hidden, t_chunk=t_chunk)

    return pl.pallas_call(
        kernel,
        out_shape=jax.ShapeDtypeStruct((T, B, hidden), jnp.float32),
        grid_spec=pltpu.PrefetchScalarGridSpec(
            num_scalar_prefetch=0,
            grid=(T // t_chunk,),
            in_specs=[
                pl.BlockSpec((t_chunk, B, G), lambda tc: (tc, 0, 0)),   # gates_x
                pl.BlockSpec((hidden, G), lambda tc: (0, 0)),           # Wh
            ],
            out_specs=pl.BlockSpec((t_chunk, B, hidden), lambda tc: (tc, 0, 0)),
            scratch_shapes=[
                pltpu.VMEM((B, hidden), jnp.float32),   # cell state c
                pltpu.VMEM((B, hidden), jnp.float32),   # hidden state h
            ],
        ),
        compiler_params=pltpu.CompilerParams(
            dimension_semantics=("arbitrary",),   # time recurrence is serial
            vmem_limit_bytes=48 * 1024 * 1024,
        ),
    )(gates_x, wh)


# ---------------------------------------------------------------------------
# Full forward pass
# ---------------------------------------------------------------------------

def char_lstm_forward(tokens, params):
    """tokens: (B, T) int32. Returns logits (B, T, vocab_size) float32."""
    emb, wx, wh, b, wo, bo = (params["embedding"], params["wx"], params["wh"],
                              params["b"], params["wo"], params["bo"])
    B, T = tokens.shape
    E = emb.shape[1]
    H = wh.shape[0]
    V = wo.shape[1]

    B_pad = _round_up(B, 8)      # sublane multiple
    E_pad = _round_up(E, 128)    # lane multiples
    H_pad = _round_up(H, 128)
    V_pad = _round_up(V, 128)

    # Embedding lookup (gather) stays in JAX glue; go time-major and pad.
    x = jnp.transpose(emb[tokens], (1, 0, 2))                       # (T, B, E)
    x = jnp.pad(x, ((0, 0), (0, B_pad - B), (0, E_pad - E)))        # (T, Bp, Ep)

    # Re-lay-out gate weights so every gate block is H_pad wide (lane aligned).
    def pad_gates(w, rows_pad):
        rows = w.shape[0]
        blocks = jnp.split(w, 4, axis=1)                            # f, i, g, o
        blocks = [jnp.pad(blk, ((0, rows_pad - rows), (0, H_pad - H)))
                  for blk in blocks]
        return jnp.concatenate(blocks, axis=1)

    wx_p = pad_gates(wx, E_pad)                                     # (Ep, 4*Hp)
    wh_p = pad_gates(wh, H_pad)                                     # (Hp, 4*Hp)
    b_p = pad_gates(b, 1)                                           # (1, 4*Hp)
    wo_p = jnp.pad(wo, ((0, H_pad - H), (0, V_pad - V)))            # (Hp, Vp)
    bo_p = jnp.pad(bo, ((0, 0), (0, V_pad - V)))                    # (1, Vp)

    # Pass A: hoisted input matmul — one large MXU matmul (M = T*B_pad).
    gates_x = _matmul_bias(x.reshape(T * B_pad, E_pad), wx_p, b_p)
    gates_x = gates_x.reshape(T, B_pad, 4 * H_pad)

    # Pass B: serial recurrence; only h @ Wh remains on the critical path.
    h_all = _lstm_recurrence(gates_x, wh_p, hidden=H_pad)           # (T, Bp, Hp)

    # Pass C: hoisted vocab projection as a large parallel matmul.
    logits = _matmul_bias(h_all.reshape(T * B_pad, H_pad), wo_p, bo_p)
    logits = logits.reshape(T, B_pad, V_pad)

    # Back to batch-major and strip padding.
    return jnp.transpose(logits, (1, 0, 2))[:B, :, :V]              # (B, T, V)


# ---------------------------------------------------------------------------
# Parameters and pure-JAX reference (mirrors the PyTorch module)
# ---------------------------------------------------------------------------

def init_params(key, vocab_size, embedding_dim, hidden_size):
    """Deterministic synthetic parameters mirroring the PyTorch __init__ shapes."""
    k_emb, k_w, k_b, k_wo, k_bo = jax.random.split(key, 5)
    E, H, V = embedding_dim, hidden_size, vocab_size
    stdv = 1.0 / jnp.sqrt(jnp.float32(H))

    embedding = jax.random.normal(k_emb, (V, E), jnp.float32)          # nn.Embedding
    w = jax.random.uniform(k_w, (E + H, 4 * H), jnp.float32, -stdv, stdv)
    b = jax.random.uniform(k_b, (4 * H,), jnp.float32, -stdv, stdv)
    b = b.at[:H].set(1.0)                                              # forget-gate bias = 1
    wo = jax.random.uniform(k_wo, (H, V), jnp.float32, -stdv, stdv)
    bo = jax.random.uniform(k_bo, (V,), jnp.float32, -stdv, stdv)

    return {
        "embedding": embedding,
        "wx": w[:E],                     # (E, 4H)
        "wh": w[E:],                     # (H, 4H)
        "b": b.reshape(1, 4 * H),
        "wo": wo,                        # (H, V)
        "bo": bo.reshape(1, V),
    }


def char_lstm_reference(tokens, params):
    """Pure-JAX reference of the PyTorch forward, for correctness checking."""
    emb, wx, wh, b, wo, bo = (params["embedding"], params["wx"], params["wh"],
                              params["b"], params["wo"], params["bo"])
    B, T = tokens.shape
    H = wh.shape[0]
    x = jnp.transpose(emb[tokens], (1, 0, 2))   # (T, B, E)

    def step(carry, xt):
        c, h = carry
        gates = xt @ wx + h @ wh + b
        f = jax.nn.sigmoid(gates[:, 0 * H:1 * H])
        i = jax.nn.sigmoid(gates[:, 1 * H:2 * H])
        g = jnp.tanh(gates[:, 2 * H:3 * H])
        o = jax.nn.sigmoid(gates[:, 3 * H:4 * H])
        c = f * c + i * g
        h = o * jnp.tanh(c)
        return (c, h), h

    init = (jnp.zeros((B, H), jnp.float32), jnp.zeros((B, H), jnp.float32))
    _, hs = jax.lax.scan(step, init, x)          # (T, B, H)
    logits = hs @ wo + bo                        # (T, B, V)
    return jnp.transpose(logits, (1, 0, 2))      # (B, T, V)


if __name__ == "__main__":
    vocab_size, embedding_dim, hidden_size = 64, 32, 64
    B, T = 4, 8

    key = jax.random.PRNGKey(0)
    k_params, k_tok = jax.random.split(key)
    params = init_params(k_params, vocab_size, embedding_dim, hidden_size)
    tokens = jax.random.randint(k_tok, (B, T), 0, vocab_size, dtype=jnp.int32)

    out = jax.block_until_ready(char_lstm_forward(tokens, params))
    ref = jax.block_until_ready(char_lstm_reference(tokens, params))

    assert out.shape == (B, T, vocab_size)
    assert jnp.allclose(out, ref, atol=1e-4, rtol=1e-4)
    print("KERNEL_OK")
</pallas_src>

<mosaic_0001>
module attributes {stable_mosaic.version = 11 : i64} {
  func.func @_matmul_bias_kernel(%arg0: i32, %arg1: i32, %arg2: i32, %arg3: memref<64x128xf32, #tpu.memory_space<vmem>>, %arg4: memref<128x256xf32, #tpu.memory_space<vmem>>, %arg5: memref<1x256xf32, #tpu.memory_space<vmem>>, %arg6: memref<64x256xf32, #tpu.memory_space<vmem>>, %arg7: memref<64x256xf32, #tpu.memory_space<vmem>>) attributes {dimension_semantics = [#tpu.dimension_semantics<parallel>, #tpu.dimension_semantics<parallel>, #tpu.dimension_semantics<arbitrary>], iteration_bounds = array<i64: 1, 2, 1>, scalar_prefetch = 0 : i64, scratch_operands = 1 : i64, tpu.core_type = #tpu.core_type<tc>, window_params = [{transform_indices = @transform_0, window_bounds = array<i64: 64, 128>}, {transform_indices = @transform_1, window_bounds = array<i64: 128, 256>}, {transform_indices = @transform_2, window_bounds = array<i64: 1, 256>}, {transform_indices = @transform_3, window_bounds = array<i64: 64, 256>}]} {
    %c0_i32 = arith.constant 0 : i32
    %0 = arith.cmpi eq, %arg2, %c0_i32 : i32
    %1 = arith.extui %0 : i1 to i32
    %c0_i32_0 = arith.constant 0 : i32
    %2 = arith.cmpi ne, %1, %c0_i32_0 : i32
    scf.if %2 {
      %cst_10 = arith.constant 0.000000e+00 : f32
      %12 = vector.broadcast %cst_10 : f32 to vector<64x256xf32>
      %c0_11 = arith.constant 0 : index
      %c0_12 = arith.constant 0 : index
      %13 = vector.load %arg7[%c0_11, %c0_12] : memref<64x256xf32, #tpu.memory_space<vmem>>, vector<64x256xf32>
      tpu.vector_store %arg7[%c0_11, %c0_12], %12 {strides = array<i32>} : memref<64x256xf32, #tpu.memory_space<vmem>>, vector<64x256xf32>,
    } else {
    }
    %c0 = arith.constant 0 : index
    %c0_1 = arith.constant 0 : index
    %3 = vector.load %arg7[%c0, %c0_1] : memref<64x256xf32, #tpu.memory_space<vmem>>, vector<64x256xf32>
    %c0_2 = arith.constant 0 : index
    %c0_3 = arith.constant 0 : index
    %4 = vector.load %arg3[%c0_2, %c0_3] : memref<64x128xf32, #tpu.memory_space<vmem>>, vector<64x128xf32>
    %c0_4 = arith.constant 0 : index
    %c0_5 = arith.constant 0 : index
    %5 = vector.load %arg4[%c0_4, %c0_5] : memref<128x256xf32, #tpu.memory_space<vmem>>, vector<128x256xf32>
    %cst = arith.constant dense<0.000000e+00> : vector<64x256xf32>
    %6 = tpu.matmul %4, %5, %cst {dimension_numbers = #tpu.dot_dimension_numbers<[1], [0], [0], [1], [0, 0, 1, 1], [], []>} : vector<64x128xf32>, vector<128x256xf32>, vector<64x256xf32> -> vector<64x256xf32>
    %7 = arith.addf %3, %6 : vector<64x256xf32>
    %c0_6 = arith.constant 0 : index
    %c0_7 = arith.constant 0 : index
    %8 = vector.load %arg7[%c0_6, %c0_7] : memref<64x256xf32, #tpu.memory_space<vmem>>, vector<64x256xf32>
    tpu.vector_store %arg7[%c0_6, %c0_7], %7 {strides = array<i32>} : memref<64x256xf32, #tpu.memory_space<vmem>>, vector<64x256xf32>,
    %c0_i32_8 = arith.constant 0 : i32
    %9 = arith.cmpi eq, %arg2, %c0_i32_8 : i32
    %10 = arith.extui %9 : i1 to i32
    %c0_i32_9 = arith.constant 0 : i32
    %11 = arith.cmpi ne, %10, %c0_i32_9 : i32
    scf.if %11 {
      %c0_10 = arith.constant 0 : index
      %c0_11 = arith.constant 0 : index
      %12 = vector.load %arg7[%c0_10, %c0_11] : memref<64x256xf32, #tpu.memory_space<vmem>>, vector<64x256xf32>
      %c0_12 = arith.constant 0 : index
      %c0_13 = arith.constant 0 : index
      %13 = vector.load %arg5[%c0_12, %c0_13] : memref<1x256xf32, #tpu.memory_space<vmem>>, vector<1x256xf32>
      %14 = vector.broadcast %13 : vector<1x256xf32> to vector<64x256xf32>
      %15 = arith.addf %12, %14 : vector<64x256xf32>
      %c0_14 = arith.constant 0 : index
      %c0_15 = arith.constant 0 : index
      %16 = vector.load %arg6[%c0_14, %c0_15] : memref<64x256xf32, #tpu.memory_space<vmem>>, vector<64x256xf32>
      tpu.vector_store %arg6[%c0_14, %c0_15], %15 {strides = array<i32>} : memref<64x256xf32, #tpu.memory_space<vmem>>, vector<64x256xf32>,
    } else {
    }
    return
  }
  func.func @transform_0(%arg0: i32, %arg1: i32, %arg2: i32) -> (i32, i32) {
    %c0_i32 = arith.constant 0 : i32
    return %arg0, %arg2 : i32, i32
  }
  func.func @transform_1(%arg0: i32, %arg1: i32, %arg2: i32) -> (i32, i32) {
    %c0_i32 = arith.constant 0 : i32
    return %arg2, %arg1 : i32, i32
  }
  func.func @transform_2(%arg0: i32, %arg1: i32, %arg2: i32) -> (i32, i32) {
    %c0_i32 = arith.constant 0 : i32
    %c0_i32_0 = arith.constant 0 : i32
    return %c0_i32, %arg1 : i32, i32
  }
  func.func @transform_3(%arg0: i32, %arg1: i32, %arg2: i32) -> (i32, i32) {
    %c0_i32 = arith.constant 0 : i32
    return %arg0, %arg1 : i32, i32
  }
}

</mosaic_0001>

<llo_original>
// kernel: tpu_custom_call.1
$region0: #{tpu_custom_call.1}
  #allocation0 [shape = 'u32[]', space=smem, size = 0x4, offset = 0x4, fixed_abs, tag = 'smem constant byte address 0x4 - core index']
  #allocation1 [shape = 'u32[144,128]{1,0:T(1,128)}', space=vmem, size = 0x12000, scoped, tag = 'internal scratch']
  #allocation2 [shape = 'f32[64,256]{1,0:T(8,128)}', space=vmem, size = 0x10000, scoped, tag = 'scratch operand']
  %s0 = inlined_call_operand.hbm [shape: f32[64,128], index: 0, kind: input, shape index: {}]
  %s1 = inlined_call_operand.hbm [shape: f32[128,512], index: 1, kind: input, shape index: {}]
  %s2 = inlined_call_operand.vmem [shape: f32[1,512], index: 2, kind: input, shape index: {}]
  %s3 = inlined_call_operand.hbm [shape: f32[64,512], index: 3, kind: output, shape index: {}]
  %s4 = sld [smem:[#allocation0]]
  $region61: #{tpu_custom_call.1} parent=0
    _
  %s6 = ssub.s32 1, %s4
  %s7 = scalar_select 0, %s6, %s4
  $region1: #{tpu_custom_call.1} parent=0
    #allocation3 [shape = 'u8[32768]{0}', space=vmem, size = 0x8000, scoped, tag = 'input window, operand 0, single buffered']
    #allocation4 [shape = 's32[2]{0}', space=sflag, size = 0x8, scoped, tag = 'scoped memory for tpu_custom_call.1']
    #allocation5 [shape = 's32[2]{0}', space=sflag, size = 0x8, scoped, tag = 'scoped memory for tpu_custom_call.1']
    #allocation6 [shape = 'u8[262144]{0}', space=vmem, size = 0x40000, scoped, tag = 'input window, operand 1']
    #allocation7 [shape = 's32[2]{0}', space=sflag, size = 0x8, scoped, tag = 'scoped memory for tpu_custom_call.1']
    #allocation8 [shape = 'u8[131072]{0}', space=vmem, size = 0x20000, scoped, tag = 'output window, operand 0']
    %8 = vsyncpa [#allocation4], 0
    %9 = vsyncpa [#allocation7], 0
    %s10 = scalar_lea.sflag [#allocation7], 1
    %11 = vsyncpa %s10, 0
    %12 = vsyncpa [#allocation5], 0
    %s13 = scalar_lea.sflag [#allocation5], 1
    %14 = vsyncpa %s13, 0
    loop: start=0, step=1, limit=4
    $region2: #{tpu_custom_call.1} parent=1 // loop_pre_header
      _
    $region3: #{tpu_custom_call.1} parent=1 // loop_header
      %s16 = sphi 0, %s20
      %p17 = scmp.ge.s32.totalorder %s16, 4
      %s23 = sphi 0, %s42
      %s24 = sphi 0, %s38
      %s25 = sphi 0, %s34
      %s26 = sphi 0, %s23
      %s27 = sphi 0, %s24
      %s28 = sphi 0, %s25
      %s29 = sphi 0, %s26
      %s30 = sphi 0, %s27
      %s31 = sphi 0, %s28
      %s47 = sphi 0, %s49
      %s50 = sphi 0, %s47
      %s51 = sphi 0, %s50
      %s67 = sphi 0, %s51
      %s75 = sphi 0, %s77
      %s78 = sphi 0, %s75
      %s79 = sphi 0, %s78
      %s95 = sphi 0, %s79
      %s101 = sphi 0, %s103
      %s104 = sphi 0, %s101
      %s105 = sphi 0, %s104
      %s121 = sphi 0, %s105
      %s129 = sphi 0, %s131
      %s132 = sphi 0, %s129
      %s133 = sphi 0, %s132
      %s149 = sphi 0, %s133
    $region4: #{tpu_custom_call.1} parent=1 // loop_header_branch
      %19 = sbr.rel (%p17) target = $region8
    $region5: #{tpu_custom_call.1} parent=1 // loop_body
      %s21 = ssub.s32 %s16, 1
      %s22 = ssub.s32 %s16, 2
      %s32 = sadd.s32 1, %s25
      %p33 = scmp.ge.s32.totalorder %s32, 1
      %s34 = scalar_select %p33, 0, %s32
      %s35 = sadd.s32 1, %s24
      %s36 = scalar_select %p33, %s35, %s24
      %p37 = scmp.ge.s32.totalorder %s36, 2
      %s38 = scalar_select %p37, 0, %s36
      %s39 = sadd.s32 1, %s23
      %s40 = scalar_select %p37, %s39, %s23
      %p41 = scmp.ge.s32.totalorder %s40, 1
      %s42 = scalar_select %p41, 0, %s40
      %s43 = ssub.s32 %s23, %s42
      %s44 = ssub.s32 %s25, %s34
      %s45 = sor.u32 %s43, %s44
      %p46 = scmp.eq.s32.totalorder %s45, 0
      %s48 = sadd.s32 %s47, 1
      %s49 = scalar_select %p46, %s47, %s48
      %p52 = pneg %p46
      %p53 = scmp.eq.s32.totalorder %s16, 1
      %p54 = por %p52, %p53
      %p55 = scmp.ne.s32.totalorder %s47, %s50
      %p56 = scmp.eq.s32.totalorder %s16, 0
      %p57 = por %p55, %p56
      %p58 = scmp.ne.s32.totalorder %s47, %s50
      %p59 = scmp.eq.s32.totalorder %s21, 1
      %p60 = por %p58, %p59
      %p61 = scmp.ne.s32.totalorder %s50, %s51
      %p62 = scmp.eq.s32.totalorder %s21, 0
      %p63 = por %p61, %p62
      %p64 = scmp.ne.s32.totalorder %s50, %s51
      %p65 = scmp.eq.s32.totalorder %s22, 1
      %p66 = por %p64, %p65
      %p68 = scmp.ne.s32.totalorder %s51, %s67
      %p69 = scmp.eq.s32.totalorder %s22, 0
      %p70 = por %p68, %p69
      %s71 = ssub.s32 %s25, %s34
      %s72 = ssub.s32 %s24, %s38
      %s73 = sor.u32 %s71, %s72
      %p74 = scmp.eq.s32.totalorder %s73, 0
      %s76 = sadd.s32 %s75, 1
      %s77 = scalar_select %p74, %s75, %s76
      %p80 = pneg %p74
      %p81 = scmp.eq.s32.totalorder %s16, 1
      %p82 = por %p80, %p81
      %p83 = scmp.ne.s32.totalorder %s75, %s78
      %p84 = scmp.eq.s32.totalorder %s16, 0
      %p85 = por %p83, %p84
      %p86 = scmp.ne.s32.totalorder %s75, %s78
      %p87 = scmp.eq.s32.totalorder %s21, 1
      %p88 = por %p86, %p87
      %p89 = scmp.ne.s32.totalorder %s78, %s79
      %p90 = scmp.eq.s32.totalorder %s21, 0
      %p91 = por %p89, %p90
      %p92 = scmp.ne.s32.totalorder %s78, %s79
      %p93 = scmp.eq.s32.totalorder %s22, 1
      %p94 = por %p92, %p93
      %p96 = scmp.ne.s32.totalorder %s79, %s95
      %p97 = scmp.eq.s32.totalorder %s22, 0
      %p98 = por %p96, %p97
      %s99 = ssub.s32 %s24, %s38
      %p100 = scmp.eq.s32.totalorder %s99, 0
      %s102 = sadd.s32 %s101, 1
      %s103 = scalar_select %p100, %s101, %s102
      %p106 = pneg %p100
      %p107 = scmp.eq.s32.totalorder %s16, 1
      %p108 = por %p106, %p107
      %p109 = scmp.ne.s32.totalorder %s101, %s104
      %p110 = scmp.eq.s32.totalorder %s16, 0
      %p111 = por %p109, %p110
      %p112 = scmp.ne.s32.totalorder %s101, %s104
      %p113 = scmp.eq.s32.totalorder %s21, 1
      %p114 = por %p112, %p113
      %p115 = scmp.ne.s32.totalorder %s104, %s105
      %p116 = scmp.eq.s32.totalorder %s21, 0
      %p117 = por %p115, %p116
      %p118 = scmp.ne.s32.totalorder %s104, %s105
      %p119 = scmp.eq.s32.totalorder %s22, 1
      %p120 = por %p118, %p119
      %p122 = scmp.ne.s32.totalorder %s105, %s121
      %p123 = scmp.eq.s32.totalorder %s22, 0
      %p124 = por %p122, %p123
      %s125 = ssub.s32 %s23, %s42
      %s126 = ssub.s32 %s24, %s38
      %s127 = sor.u32 %s125, %s126
      %p128 = scmp.eq.s32.totalorder %s127, 0
      %s130 = sadd.s32 %s129, 1
      %s131 = scalar_select %p128, %s129, %s130
      %p134 = pneg %p128
      %p135 = scmp.eq.s32.totalorder %s16, 1
      %p136 = por %p134, %p135
      %p137 = scmp.ne.s32.totalorder %s129, %s132
      %p138 = scmp.eq.s32.totalorder %s16, 0
      %p139 = por %p137, %p138
      %p140 = scmp.ne.s32.totalorder %s129, %s132
      %p141 = scmp.eq.s32.totalorder %s21, 1
      %p142 = por %p140, %p141
      %p143 = scmp.ne.s32.totalorder %s132, %s133
      %p144 = scmp.eq.s32.totalorder %s21, 0
      %p145 = por %p143, %p144
      %p146 = scmp.ne.s32.totalorder %s132, %s133
      %p147 = scmp.eq.s32.totalorder %s22, 1
      %p148 = por %p146, %p147
      %p150 = scmp.ne.s32.totalorder %s133, %s149
      %p151 = scmp.eq.s32.totalorder %s22, 0
      %p152 = por %p150, %p151
      %p153 = scmp.le.s32.totalorder 1, %s16
      %p154 = scmp.lt.s32.totalorder %s16, 3
      %p155 = pnand %p153, %p154
      %p156 = pneg %p155
      // Predicated region
      $region9: #{tpu_custom_call.1} parent=5 // pred_check
        _
      $region10: #{tpu_custom_call.1} parent=5 // pred_check_branch
        %158 = sbr.rel (%p155) target = $region12
      $region11: #{tpu_custom_call.1} parent=5 // pred_region
        %s159 = ssub.s32 %s16, 1
        // Predicated region
        $region13: #{tpu_custom_call.1} parent=11 // pred_check
          %p160 = pneg %p63
        $region14: #{tpu_custom_call.1} parent=11 // pred_check_branch
          %162 = sbr.rel (%p160) target = $region16
        $region15: #{tpu_custom_call.1} parent=11 // pred_region
          %s163 = smul.u32 8, %s26
          %s165 = ssub.s32 1024, 1024
          %166 = vsyncadd [#allocation4], %s165
          %s167 = sadd.s32 %s28, %s163
          %s168 = smul.addr %s167, 128
          %s169 = scalar_lea.hbm %s0, %s168
          %s170 = sshll.u32 [#allocation3], 4
          %s171 = int_to_ptr.vmem [resolvable:$true] %s170
          %176 = dma.hbm_to_vmem [thread:$0]  %s169, 1024, %s171, [#allocation4], 128, 128, 8
        $region16: #{tpu_custom_call.1} parent=11 // pred_fallthru
          _
      $region12: #{tpu_custom_call.1} parent=5 // pred_fallthru
        _
      %p177 = scmp.lt.s32.totalorder %s16, 2
      // Predicated region
      $region17: #{tpu_custom_call.1} parent=5 // pred_check
        %p178 = pneg %p177
      $region18: #{tpu_custom_call.1} parent=5 // pred_check_branch
        %180 = sbr.rel (%p178) target = $region20
      $region19: #{tpu_custom_call.1} parent=5 // pred_region
        // Predicated region
        $region21: #{tpu_custom_call.1} parent=19 // pred_check
          %p181 = pneg %p85
        $region22: #{tpu_custom_call.1} parent=19 // pred_check_branch
          %183 = sbr.rel (%p181) target = $region24
        $region23: #{tpu_custom_call.1} parent=19 // pred_region
          %s184 = sand.u32 %s75, 1
          %s185 = scalar_lea.sflag [#allocation7], %s184
          %s186 = sand.u32 %s75, 1
          %s187 = smul.addr %s186, 256
          %s188 = scalar_lea.vmem [#allocation6], %s187
          %s189 = smul.u32 16, %s25
          %s190 = smul.u32 2, %s24
          %s192 = ssub.s32 4096, 4096
          %193 = vsyncadd %s185, %s192
          %s194 = smul.addr %s189, 4
          %s195 = sadd.s32 %s190, %s194
          %s196 = smul.addr %s195, 128
          %s197 = scalar_lea.hbm %s1, %s196
          %s198 = sshll.u32 %s188, 4
          %s199 = int_to_ptr.vmem [resolvable:$true] %s198
          %204 = dma.hbm_to_vmem [thread:$0]  %s197, 4096, %s199, %s185, 512, 256, 16
        $region24: #{tpu_custom_call.1} parent=19 // pred_fallthru
          _
        // Predicated region
        $region25: #{tpu_custom_call.1} parent=19 // pred_check
          %p205 = pneg %p111
        $region26: #{tpu_custom_call.1} parent=19 // pred_check_branch
          %207 = sbr.rel (%p205) target = $region28
        $region27: #{tpu_custom_call.1} parent=19 // pred_region
          %s208 = smul.u32 2, %s24
          %p209 = scmp.lt.s32.totalorder %s208, 3
          %s210 = scalar_select %p209, %s208, 3
          %s211 = scalar_lea.vmem %s2, %s210
          %s212 = smul.u32 2, %s24
        $region28: #{tpu_custom_call.1} parent=19 // pred_fallthru
          _
      $region20: #{tpu_custom_call.1} parent=5 // pred_fallthru
        _
      %p213 = scmp.le.s32.totalorder 1, %s16
      %p214 = scmp.lt.s32.totalorder %s16, 3
      %p215 = pnand %p213, %p214
      %p216 = pneg %p215
      // Predicated region
      $region29: #{tpu_custom_call.1} parent=5 // pred_check
        _
      $region30: #{tpu_custom_call.1} parent=5 // pred_check_branch
        %218 = sbr.rel (%p215) target = $region32
      $region31: #{tpu_custom_call.1} parent=5 // pred_region
        %s219 = ssub.s32 %s16, 1
        // Predicated region
        $region33: #{tpu_custom_call.1} parent=31 // pred_check
          %p220 = pneg %p63
        $region34: #{tpu_custom_call.1} parent=31 // pred_check_branch
          %222 = sbr.rel (%p220) target = $region36
        $region35: #{tpu_custom_call.1} parent=31 // pred_region
          %223 = dma.done [#allocation4], 1024
        $region36: #{tpu_custom_call.1} parent=31 // pred_fallthru
          _
        %s224 = sand.u32 %s78, 1
        %s225 = scalar_lea.sflag [#allocation7], %s224
        %s226 = sand.u32 %s78, 1
        %s227 = smul.addr %s226, 256
        %s228 = scalar_lea.vmem [#allocation6], %s227
        // Predicated region
        $region37: #{tpu_custom_call.1} parent=31 // pred_check
          %p229 = pneg %p91
        $region38: #{tpu_custom_call.1} parent=31 // pred_check_branch
          %231 = sbr.rel (%p229) target = $region40
        $region39: #{tpu_custom_call.1} parent=31 // pred_region
          %232 = dma.done %s225, 4096
        $region40: #{tpu_custom_call.1} parent=31 // pred_fallthru
          _
        %p233 = pneg %p63
        %p234 = pneg %p60
        %s235 = sand.u32 %s78, 1
        %s236 = scalar_lea.sflag [#allocation7], %s235
        %s237 = sand.u32 %s78, 1
        %s238 = smul.addr %s237, 256
        %s239 = scalar_lea.vmem [#allocation6], %s238
        %p240 = pneg %p91
        %p241 = pneg %p88
        %s242 = smul.u32 2, %s27
        %p243 = scmp.lt.s32.totalorder %s242, 3
        %s244 = scalar_select %p243, %s242, 3
        %s245 = scalar_lea.vmem %s2, %s244
        %p246 = pneg %p117
        %p247 = pneg %p114
        %p248 = pneg %p145
        %p249 = pneg %p142
        %s250 = sand.u32 %s132, 1
        %s251 = scalar_lea.sflag [#allocation5], %s250
        %s252 = sand.u32 %s132, 1
        %s253 = smul.addr %s252, 128
        %s254 = scalar_lea.vmem [#allocation8], %s253
        %s255 = smul.u32 8, %s26
        %s256 = smul.u32 16, %s28
        %s257 = smul.u32 2, %s27
        %s258 = smul.u32 2, %s27
        %p259 = scmp.lt.s32.totalorder %s258, 3
        %s260 = scalar_select %p259, %s258, 3
        %s261 = scalar_lea.vmem %s2, %s260
        %s262 = smul.u32 2, %s27
        %s263 = smul.u32 8, %s26
        %s264 = smul.u32 2, %s27
        %p265 = scmp.eq.s32.totalorder %s28, 0
        // Predicated region
        $region41: #{tpu_custom_call.1} parent=31 // pred_check
          %p266 = pneg %p265
        $region42: #{tpu_custom_call.1} parent=31 // pred_check_branch
          %268 = sbr.rel (%p266) target = $region44
        $region43: #{tpu_custom_call.1} parent=31 // pred_region
          %269 = vst [vmem:[#allocation2] sm:$0xff] 0.0
          %270 = vst [vmem:[#allocation2 + $0x8] sm:$0xff] 0.0
          %271 = vst [vmem:[#allocation2 + $0x10] sm:$0xff] 0.0
          %272 = vst [vmem:[#allocation2 + $0x18] sm:$0xff] 0.0
          %273 = vst [vmem:[#allocation2 + $0x20] sm:$0xff] 0.0
          %274 = vst [vmem:[#allocation2 + $0x28] sm:$0xff] 0.0
          %275 = vst [vmem:[#allocation2 + $0x30] sm:$0xff] 0.0
          %276 = vst [vmem:[#allocation2 + $0x38] sm:$0xff] 0.0
          %277 = vst [vmem:[#allocation2 + $0x40] sm:$0xff] 0.0
          %278 = vst [vmem:[#allocation2 + $0x48] sm:$0xff] 0.0
          %279 = vst [vmem:[#allocation2 + $0x50] sm:$0xff] 0.0
          %280 = vst [vmem:[#allocation2 + $0x58] sm:$0xff] 0.0
          %281 = vst [vmem:[#allocation2 + $0x60] sm:$0xff] 0.0
          %282 = vst [vmem:[#allocation2 + $0x68] sm:$0xff] 0.0
          %283 = vst [vmem:[#allocation2 + $0x70] sm:$0xff] 0.0
          %284 = vst [vmem:[#allocation2 + $0x78] sm:$0xff] 0.0
        $region44: #{tpu_custom_call.1} parent=31 // pred_fallthru
          _
        %v285 = vld [vmem:[#allocation2] sm:$0xff]
        %v286 = vld [vmem:[#allocation2 + $0x8] sm:$0xff]
        %v287 = vld [vmem:[#allocation2 + $0x10] sm:$0xff]
        %v288 = vld [vmem:[#allocation2 + $0x18] sm:$0xff]
        %v289 = vld [vmem:[#allocation2 + $0x20] sm:$0xff]
        %v290 = vld [vmem:[#allocation2 + $0x28] sm:$0xff]
        %v291 = vld [vmem:[#allocation2 + $0x30] sm:$0xff]
        %v292 = vld [vmem:[#allocation2 + $0x38] sm:$0xff]
        %v293 = vld [vmem:[#allocation2 + $0x40] sm:$0xff]
        %v294 = vld [vmem:[#allocation2 + $0x48] sm:$0xff]
        %v295 = vld [vmem:[#allocation2 + $0x50] sm:$0xff]
        %v296 = vld [vmem:[#allocation2 + $0x58] sm:$0xff]
        %v297 = vld [vmem:[#allocation2 + $0x60] sm:$0xff]
        %v298 = vld [vmem:[#allocation2 + $0x68] sm:$0xff]
        %v299 = vld [vmem:[#allocation2 + $0x70] sm:$0xff]
        %v300 = vld [vmem:[#allocation2 + $0x78] sm:$0xff]
        %v301 = vld [vmem:[#allocation3] sm:$0xff]
        %v302 = vld [vmem:[#allocation3 + $0x8] sm:$0xff]
        %v303 = vld [vmem:[#allocation3 + $0x10] sm:$0xff]
        %v304 = vld [vmem:[#allocation3 + $0x18] sm:$0xff]
        %v305 = vld [vmem:[#allocation3 + $0x20] sm:$0xff]
        %v306 = vld [vmem:[#allocation3 + $0x28] sm:$0xff]
        %v307 = vld [vmem:[#allocation3 + $0x30] sm:$0xff]
        %v308 = vld [vmem:[#allocation3 + $0x38] sm:$0xff]
        %v309 = vld [vmem:[%s228] sm:$0xff]
        %v310 = vld [vmem:[%s228 + $0x8] sm:$0xff]
        %v311 = vld [vmem:[%s228 + $0x10] sm:$0xff]
        %v312 = vld [vmem:[%s228 + $0x18] sm:$0xff]
        %v313 = vld [vmem:[%s228 + $0x20] sm:$0xff]
        %v314 = vld [vmem:[%s228 + $0x28] sm:$0xff]
        %v315 = vld [vmem:[%s228 + $0x30] sm:$0xff]
        %v316 = vld [vmem:[%s228 + $0x38] sm:$0xff]
        %v317 = vld [vmem:[%s228 + $0x40] sm:$0xff]
        %v318 = vld [vmem:[%s228 + $0x48] sm:$0xff]
        %v319 = vld [vmem:[%s228 + $0x50] sm:$0xff]
        %v320 = vld [vmem:[%s228 + $0x58] sm:$0xff]
        %v321 = vld [vmem:[%s228 + $0x60] sm:$0xff]
        %v322 = vld [vmem:[%s228 + $0x68] sm:$0xff]
        %v323 = vld [vmem:[%s228 + $0x70] sm:$0xff]
        %v324 = vld [vmem:[%s228 + $0x78] sm:$0xff]
        %v325 = vld [vmem:[%s228 + $0x80] sm:$0xff]
        %v326 = vld [vmem:[%s228 + $0x88] sm:$0xff]
        %v327 = vld [vmem:[%s228 + $0x90] sm:$0xff]
        %v328 = vld [vmem:[%s228 + $0x98] sm:$0xff]
        %v329 = vld [vmem:[%s228 + $0xa0] sm:$0xff]
        %v330 = vld [vmem:[%s228 + $0xa8] sm:$0xff]
        %v331 = vld [vmem:[%s228 + $0xb0] sm:$0xff]
        %v332 = vld [vmem:[%s228 + $0xb8] sm:$0xff]
        %v333 = vld [vmem:[%s228 + $0xc0] sm:$0xff]
        %v334 = vld [vmem:[%s228 + $0xc8] sm:$0xff]
        %v335 = vld [vmem:[%s228 + $0xd0] sm:$0xff]
        %v336 = vld [vmem:[%s228 + $0xd8] sm:$0xff]
        %v337 = vld [vmem:[%s228 + $0xe0] sm:$0xff]
        %v338 = vld [vmem:[%s228 + $0xe8] sm:$0xff]
        %v339 = vld [vmem:[%s228 + $0xf0] sm:$0xff]
        %v340 = vld [vmem:[%s228 + $0xf8] sm:$0xff]
        %341 = vmatprep.subr.mxu0 %v310
        %342 = vmatpush1.msra.mxu0 %v309
        %343 = vmatprep.subr.mxu0 %v312
        %344 = vmatpush1.msra.mxu0 %v311
        %345 = vmatprep.subr.mxu0 %v314
        %346 = vmatpush1.msra.mxu0 %v313
        %347 = vmatprep.subr.mxu0 %v316
        %348 = vmatpush1.msra.mxu0 %v315
        %349 = vmatprep.subr.mxu0 %v318
        %350 = vmatpush1.msra.mxu0 %v317
        %351 = vmatprep.subr.mxu0 %v320
        %352 = vmatpush1.msra.mxu0 %v319
        %353 = vmatprep.subr.mxu0 %v322
        %354 = vmatpush1.msra.mxu0 %v321
        %355 = vmatprep.subr.mxu0 %v324
        %356 = vmatpush1.msra.mxu0 %v323
        %357 = vmatprep.subr.mxu0 %v326
        %358 = vmatpush1.msra.mxu0 %v325
        %359 = vmatprep.subr.mxu0 %v328
        %360 = vmatpush1.msra.mxu0 %v327
        %361 = vmatprep.subr.mxu0 %v330
        %362 = vmatpush1.msra.mxu0 %v329
        %363 = vmatprep.subr.mxu0 %v332
        %364 = vmatpush1.msra.mxu0 %v331
        %365 = vmatprep.subr.mxu0 %v334
        %366 = vmatpush1.msra.mxu0 %v333
        %367 = vmatprep.subr.mxu0 %v336
        %368 = vmatpush1.msra.mxu0 %v335
        %369 = vmatprep.subr.mxu0 %v338
        %370 = vmatpush1.msra.mxu0 %v337
        %371 = vmatprep.subr.mxu0 %v340
        %372 = vmatpush1.msra.mxu0 %v339
        %373 = vmatprep.subr.mxu0 0.0
        %374 = vmatpush1.msra.mxu0 0.0
        %375 = vmatprep.subr.mxu0 0.0
        %376 = vmatpush1.msra.mxu0 0.0
        %377 = vmatprep.subr.mxu0 0.0
        %378 = vmatpush1.msra.mxu0 0.0
        %379 = vmatprep.subr.mxu0 0.0
        %380 = vmatpush1.msra.mxu0 0.0
        %381 = vmatprep.subr.mxu0 0.0
        %382 = vmatpush1.msra.mxu0 0.0
        %383 = vmatprep.subr.mxu0 0.0
        %384 = vmatpush1.msra.mxu0 0.0
        %385 = vmatprep.subr.mxu0 0.0
        %386 = vmatpush1.msra.mxu0 0.0
        %387 = vmatprep.subr.mxu0 0.0
        %388 = vmatpush1.msra.mxu0 0.0
        %389 = vmatprep.subr.mxu0 0.0
        %390 = vmatpush1.msra.mxu0 0.0
        %391 = vmatprep.subr.mxu0 0.0
        %392 = vmatpush1.msra.mxu0 0.0
        %393 = vmatprep.subr.mxu0 0.0
        %394 = vmatpush1.msra.mxu0 0.0
        %395 = vmatprep.subr.mxu0 0.0
        %396 = vmatpush1.msra.mxu0 0.0
        %397 = vmatprep.subr.mxu0 0.0
        %398 = vmatpush1.msra.mxu0 0.0
        %399 = vmatprep.subr.mxu0 0.0
        %400 = vmatpush1.msra.mxu0 0.0
        %401 = vmatprep.subr.mxu0 0.0
        %402 = vmatpush1.msra.mxu0 0.0
        %403 = vmatprep.subr.mxu0 0.0
        %404 = vmatpush1.msra.mxu0 0.0
        %405 = vmatprep.mubr.f32.mxu0 0.0
        %406 = vmatmul.mubr.f32.gmra.mrb[0].mxu0 %v301
        %v407 = vpop.f32.mrb[0].mxu0
        %v408 = vadd.f32 0.0, %v407
        %v409 = vpop.f32.mrb[0].mxu0
        %v410 = vadd.f32 0.0, %v409
        %411 = vmatprep.mubr.f32.mxu0 0.0
        %412 = vmatmul.mubr.f32.gmra.mrb[0].mxu0 %v302
        %v413 = vpop.f32.mrb[0].mxu0
        %v414 = vadd.f32 0.0, %v413
        %v415 = vpop.f32.mrb[0].mxu0
        %v416 = vadd.f32 0.0, %v415
        %417 = vmatprep.mubr.f32.mxu0 0.0
        %418 = vmatmul.mubr.f32.gmra.mrb[0].mxu0 %v303
        %v419 = vpop.f32.mrb[0].mxu0
        %v420 = vadd.f32 0.0, %v419
        %v421 = vpop.f32.mrb[0].mxu0
        %v422 = vadd.f32 0.0, %v421
        %423 = vmatprep.mubr.f32.mxu0 0.0
        %424 = vmatmul.mubr.f32.gmra.mrb[0].mxu0 %v304
        %v425 = vpop.f32.mrb[0].mxu0
        %v426 = vadd.f32 0.0, %v425
        %v427 = vpop.f32.mrb[0].mxu0
        %v428 = vadd.f32 0.0, %v427
        %429 = vmatprep.mubr.f32.mxu0 0.0
        %430 = vmatmul.mubr.f32.gmra.mrb[0].mxu0 %v305
        %v431 = vpop.f32.mrb[0].mxu0
        %v432 = vadd.f32 0.0, %v431
        %v433 = vpop.f32.mrb[0].mxu0
        %v434 = vadd.f32 0.0, %v433
        %435 = vmatprep.mubr.f32.mxu0 0.0
        %436 = vmatmul.mubr.f32.gmra.mrb[0].mxu0 %v306
        %v437 = vpop.f32.mrb[0].mxu0
        %v438 = vadd.f32 0.0, %v437
        %v439 = vpop.f32.mrb[0].mxu0
        %v440 = vadd.f32 0.0, %v439
        %441 = vmatprep.mubr.f32.mxu0 0.0
        %442 = vmatmul.mubr.f32.gmra.mrb[0].mxu0 %v307
        %v443 = vpop.f32.mrb[0].mxu0
        %v444 = vadd.f32 0.0, %v443
        %v445 = vpop.f32.mrb[0].mxu0
        %v446 = vadd.f32 0.0, %v445
        %447 = vmatprep.mubr.f32.mxu0 0.0
        %448 = vmatmul.mubr.f32.gmra.mrb[0].mxu0 %v308
        %v449 = vpop.f32.mrb[0].mxu0
        %v450 = vadd.f32 0.0, %v449
        %v451 = vpop.f32.mrb[0].mxu0
        %v452 = vadd.f32 0.0, %v451
        %453 = vdwg.mxu0
        %v454 = vadd.f32 %v285, %v408
        %v455 = vadd.f32 %v286, %v410
        %v456 = vadd.f32 %v287, %v414
        %v457 = vadd.f32 %v288, %v416
        %v458 = vadd.f32 %v289, %v420
        %v459 = vadd.f32 %v290, %v422
        %v460 = vadd.f32 %v291, %v426
        %v461 = vadd.f32 %v292, %v428
        %v462 = vadd.f32 %v293, %v432
        %v463 = vadd.f32 %v294, %v434
        %v464 = vadd.f32 %v295, %v438
        %v465 = vadd.f32 %v296, %v440
        %v466 = vadd.f32 %v297, %v444
        %v467 = vadd.f32 %v298, %v446
        %v468 = vadd.f32 %v299, %v450
        %v469 = vadd.f32 %v300, %v452
        %470 = vst [vmem:[#allocation2] sm:$0xff] %v454
        %471 = vst [vmem:[#allocation2 + $0x8] sm:$0xff] %v455
        %472 = vst [vmem:[#allocation2 + $0x10] sm:$0xff] %v456
        %473 = vst [vmem:[#allocation2 + $0x18] sm:$0xff] %v457
        %474 = vst [vmem:[#allocation2 + $0x20] sm:$0xff] %v458
        %475 = vst [vmem:[#allocation2 + $0x28] sm:$0xff] %v459
        %476 = vst [vmem:[#allocation2 + $0x30] sm:$0xff] %v460
        %477 = vst [vmem:[#allocation2 + $0x38] sm:$0xff] %v461
        %478 = vst [vmem:[#allocation2 + $0x40] sm:$0xff] %v462
        %479 = vst [vmem:[#allocation2 + $0x48] sm:$0xff] %v463
        %480 = vst [vmem:[#allocation2 + $0x50] sm:$0xff] %v464
        %481 = vst [vmem:[#allocation2 + $0x58] sm:$0xff] %v465
        %482 = vst [vmem:[#allocation2 + $0x60] sm:$0xff] %v466
        %483 = vst [vmem:[#allocation2 + $0x68] sm:$0xff] %v467
        %484 = vst [vmem:[#allocation2 + $0x70] sm:$0xff] %v468
        %485 = vst [vmem:[#allocation2 + $0x78] sm:$0xff] %v469
        // Predicated region
        $region45: #{tpu_custom_call.1} parent=31 // pred_check
          %p486 = pneg %p265
        $region46: #{tpu_custom_call.1} parent=31 // pred_check_branch
          %488 = sbr.rel (%p486) target = $region48
        $region47: #{tpu_custom_call.1} parent=31 // pred_region
          %v489 = vld [vmem:[#allocation2] sm:$0xff]
          %v490 = vld [vmem:[#allocation2 + $0x8] sm:$0xff]
          %v491 = vld [vmem:[#allocation2 + $0x10] sm:$0xff]
          %v492 = vld [vmem:[#allocation2 + $0x18] sm:$0xff]
          %v493 = vld [vmem:[#allocation2 + $0x20] sm:$0xff]
          %v494 = vld [vmem:[#allocation2 + $0x28] sm:$0xff]
          %v495 = vld [vmem:[#allocation2 + $0x30] sm:$0xff]
          %v496 = vld [vmem:[#allocation2 + $0x38] sm:$0xff]
          %v497 = vld [vmem:[#allocation2 + $0x40] sm:$0xff]
          %v498 = vld [vmem:[#allocation2 + $0x48] sm:$0xff]
          %v499 = vld [vmem:[#allocation2 + $0x50] sm:$0xff]
          %v500 = vld [vmem:[#allocation2 + $0x58] sm:$0xff]
          %v501 = vld [vmem:[#allocation2 + $0x60] sm:$0xff]
          %v502 = vld [vmem:[#allocation2 + $0x68] sm:$0xff]
          %v503 = vld [vmem:[#allocation2 + $0x70] sm:$0xff]
          %v504 = vld [vmem:[#allocation2 + $0x78] sm:$0xff]
          %v505 = vld [vmem:[%s261] sm:$0x3]
          %v507 = vlaneseq
          %v508 = vshrl.u32 %v507, 7
          %v509 = vsub.s32 0, %v508
          %v510 = vrot.slane %v505, %v509
          %v511 = vlaneseq
          %v512 = vshrl.u32 %v511, 7
          %v513 = vsub.s32 1, %v512
          %v514 = vrot.slane %v505, %v513
          %v517 = vadd.f32 %v489, %v510
          %v518 = vadd.f32 %v490, %v514
          %v519 = vadd.f32 %v491, %v510
          %v520 = vadd.f32 %v492, %v514
          %v521 = vadd.f32 %v493, %v510
          %v522 = vadd.f32 %v494, %v514
          %v523 = vadd.f32 %v495, %v510
          %v524 = vadd.f32 %v496, %v514
          %v525 = vadd.f32 %v497, %v510
          %v526 = vadd.f32 %v498, %v514
          %v527 = vadd.f32 %v499, %v510
          %v528 = vadd.f32 %v500, %v514
          %v529 = vadd.f32 %v501, %v510
          %v530 = vadd.f32 %v502, %v514
          %v531 = vadd.f32 %v503, %v510
          %v532 = vadd.f32 %v504, %v514
          %533 = vst [vmem:[%s254] sm:$0xff] %v517
          %534 = vst [vmem:[%s254 + $0x8] sm:$0xff] %v518
          %535 = vst [vmem:[%s254 + $0x10] sm:$0xff] %v519
          %536 = vst [vmem:[%s254 + $0x18] sm:$0xff] %v520
          %537 = vst [vmem:[%s254 + $0x20] sm:$0xff] %v521
          %538 = vst [vmem:[%s254 + $0x28] sm:$0xff] %v522
          %539 = vst [vmem:[%s254 + $0x30] sm:$0xff] %v523
          %540 = vst [vmem:[%s254 + $0x38] sm:$0xff] %v524
          %541 = vst [vmem:[%s254 + $0x40] sm:$0xff] %v525
          %542 = vst [vmem:[%s254 + $0x48] sm:$0xff] %v526
          %543 = vst [vmem:[%s254 + $0x50] sm:$0xff] %v527
          %544 = vst [vmem:[%s254 + $0x58] sm:$0xff] %v528
          %545 = vst [vmem:[%s254 + $0x60] sm:$0xff] %v529
          %546 = vst [vmem:[%s254 + $0x68] sm:$0xff] %v530
          %547 = vst [vmem:[%s254 + $0x70] sm:$0xff] %v531
          %548 = vst [vmem:[%s254 + $0x78] sm:$0xff] %v532
        $region48: #{tpu_custom_call.1} parent=31 // pred_fallthru
          _
        %s549 = sand.u32 %s132, 1
        %s550 = scalar_lea.sflag [#allocation5], %s549
        %s551 = sand.u32 %s132, 1
        %s552 = smul.addr %s551, 128
        %s553 = scalar_lea.vmem [#allocation8], %s552
        // Predicated region
        $region49: #{tpu_custom_call.1} parent=31 // pred_check
          %p554 = pneg %p142
        $region50: #{tpu_custom_call.1} parent=31 // pred_check_branch
          %556 = sbr.rel (%p554) target = $region52
        $region51: #{tpu_custom_call.1} parent=31 // pred_region
          %s557 = smul.u32 8, %s26
          %s558 = smul.u32 2, %s27
          %s560 = ssub.s32 2048, 2048
          %561 = vsyncadd %s550, %s560
          %s562 = smul.addr %s557, 4
          %s563 = sadd.s32 %s558, %s562
          %s564 = smul.addr %s563, 128
          %s565 = scalar_lea.hbm %s3, %s564
          %s566 = sshll.u32 %s553, 4
          %s567 = int_to_ptr.vmem [resolvable:$true] %s566
          %572 = dma.vmem_to_hbm [thread:$0]  %s567, 2048, %s565, %s550, 256, 512, 16
        $region52: #{tpu_custom_call.1} parent=31 // pred_fallthru
          _
      $region32: #{tpu_custom_call.1} parent=5 // pred_fallthru
        _
      %p573 = scmp.le.s32.totalorder 2, %s16
      // Predicated region
      $region53: #{tpu_custom_call.1} parent=5 // pred_check
        %p574 = pneg %p573
      $region54: #{tpu_custom_call.1} parent=5 // pred_check_branch
        %576 = sbr.rel (%p574) target = $region56
      $region55: #{tpu_custom_call.1} parent=5 // pred_region
        %s577 = ssub.s32 %s16, 2
        // Predicated region
        $region57: #{tpu_custom_call.1} parent=55 // pred_check
          %p578 = pneg %p148
        $region58: #{tpu_custom_call.1} parent=55 // pred_check_branch
          %580 = sbr.rel (%p578) target = $region60
        $region59: #{tpu_custom_call.1} parent=55 // pred_region
          %s581 = sand.u32 %s133, 1
          %s582 = scalar_lea.sflag [#allocation5], %s581
          %s583 = sand.u32 %s133, 1
          %s584 = smul.addr %s583, 128
          %s585 = scalar_lea.vmem [#allocation8], %s584
          %586 = dma.done %s582, 2048
        $region60: #{tpu_custom_call.1} parent=55 // pred_fallthru
          _
      $region56: #{tpu_custom_call.1} parent=5 // pred_fallthru
        _
    $region6: #{tpu_custom_call.1} parent=1 // loop_footer
      %s20 = sadd.s32 1, %s16
    $region7: #{tpu_custom_call.1} parent=1 // loop_footer_branch
      %15 = sbr.rel target = $region3
    $region8: #{tpu_custom_call.1} parent=1 // loop_exit
      _
    %587 = vsyncpa [#allocation4], 1
    %s588 = scalar_lea.sflag [#allocation4], 1
    %589 = vsyncpa %s588, 1
    %590 = vsyncpa [#allocation7], 1
    %s591 = scalar_lea.sflag [#allocation7], 1
    %592 = vsyncpa %s591, 1
    %593 = vsyncpa [#allocation5], 1
    %s594 = scalar_lea.sflag [#allocation5], 1
    %595 = vsyncpa %s594, 1

</llo_original>
